<compile_context>
chip_gen: v7x
topology: tpu7x:2x2x1
jax: 0.10.0
libtpu: 0.0.40
codegen_flags: <defaults>
</compile_context>

<pallas_src>
import functools

import jax
import jax.numpy as jnp
from jax.experimental import pallas as pl
from jax.experimental.pallas import tpu as pltpu


# ----------------------------------------------------------------------------
# Kernel 1: abs-max reduction over the (V, D) weight table.
# ----------------------------------------------------------------------------
def _absmax_kernel(w_ref, acc_ref):
    # acc_ref is an (8, D) accumulator resident across the inner (arbitrary)
    # grid axis; per-step work is pure VPU elementwise max (no XLU reduce).
    @pl.when(pl.program_id(1) == 0)
    def _():
        acc_ref[...] = jnp.zeros_like(acc_ref)

    rows, d = w_ref.shape
    w = jnp.abs(w_ref[...]).reshape(rows // 8, 8, d)   # group rows into vreg slabs
    acc_ref[...] = jnp.maximum(acc_ref[...], jnp.max(w, axis=0))


def weight_absmax(weight, tile_rows=512, n_splits=2):
    """max(|weight|) as a scalar, computed with large HBM-roofline tiles."""
    V, D = weight.shape
    # Keep the double-buffered input tile around <= 8 MiB of VMEM (safe on v7x).
    max_rows = max(8, ((4 * 1024 * 1024) // (D * 4)) // 8 * 8)
    tile_rows = min(tile_rows, max_rows, (V // 8) * 8)
    if tile_rows < 8:
        # Table smaller than one sublane tile: not worth a kernel launch.
        return jnp.max(jnp.abs(weight))

    steps = V // tile_rows            # full tiles covered by the kernel
    v_main = steps * tile_rows
    if steps % n_splits != 0:
        n_splits = 1                  # keep the grid exact
    steps_per_split = steps // n_splits

    partial = pl.pallas_call(
        _absmax_kernel,
        out_shape=jax.ShapeDtypeStruct((n_splits * 8, D), jnp.float32),
        grid_spec=pltpu.PrefetchScalarGridSpec(
            num_scalar_prefetch=0,
            grid=(n_splits, steps_per_split),
            in_specs=[pl.BlockSpec(
                (tile_rows, D),
                lambda c, i: (c * steps_per_split + i, 0))],
            out_specs=pl.BlockSpec((8, D), lambda c, i: (c, 0)),
        ),
        compiler_params=pltpu.CompilerParams(
            # leading split axis is parallel -> shards across v7x's 2 TCs,
            # neutral on v5e/v6e; reduction axis stays arbitrary.
            dimension_semantics=("parallel", "arbitrary")),
    )(weight)

    m = jnp.max(partial)              # tiny final reduce (n_splits*8 x D)
    if v_main < V:
        # Remainder rows (< tile_rows) handled in plain JAX (zero cost-ish).
        m = jnp.maximum(m, jnp.max(jnp.abs(weight[v_main:])))
    return m


# ----------------------------------------------------------------------------
# Kernel 2: gather T weight rows per grid step via manual DMA (double buffered)
# and fuse quantize + dequantize on the (T, D) tile.
# ----------------------------------------------------------------------------
def _gather_dequant_kernel(ids_ref, scale_ref, w_hbm, out_ref, gbuf, sems, *,
                           tokens_per_tile, n):
    step = pl.program_id(0)
    nsteps = pl.num_programs(0)
    slot = step & 1

    def start_fetch(tile_idx, dst_slot):
        base = tile_idx * tokens_per_tile
        for t in range(tokens_per_tile):
            row = ids_ref[base + t]
            pltpu.make_async_copy(
                w_hbm.at[row], gbuf.at[dst_slot, t], sems.at[dst_slot, t]
            ).start()

    # Prime the pipeline on the first step.
    @pl.when(step == 0)
    def _():
        start_fetch(0, 0)

    # Prefetch the next tile's rows while we process the current tile.
    @pl.when(step + 1 < nsteps)
    def _():
        start_fetch(step + 1, 1 - slot)

    # Wait for the current tile's row gathers.
    for t in range(tokens_per_tile):
        pltpu.make_async_copy(
            w_hbm.at[0], gbuf.at[slot, t], sems.at[slot, t]
        ).wait()

    scale = scale_ref[0]
    inv_scale = scale_ref[1]          # hoisted reciprocal from the wrapper
    w = gbuf[slot]                    # (T, D) gathered rows, full vregs
    q = jnp.clip(jnp.round(w * inv_scale), -n, n - 1.0)
    out_ref[...] = (q * scale).astype(out_ref.dtype)   # (T, D) unmasked store


def quant_embedding_lookup(ids_flat, scale, inv_scale, weight, weight_bit,
                           tokens_per_tile=32):
    N = ids_flat.shape[0]
    V, D = weight.shape
    n = 2 ** (weight_bit - 1) - 1

    # Batch T tokens per grid step (T multiple of 8 -> sublane-full output).
    tokens_per_tile = max(8, min(tokens_per_tile, ((N + 7) // 8) * 8))
    n_pad = pl.cdiv(N, tokens_per_tile) * tokens_per_tile

    ids = jnp.clip(ids_flat.astype(jnp.int32), 0, V - 1)  # guard OOB gathers
    if n_pad != N:
        ids = jnp.pad(ids, (0, n_pad - N))                 # pad with row 0

    scale_pair = jnp.stack([scale, inv_scale]).astype(jnp.float32)  # (2,) SMEM

    kernel = functools.partial(_gather_dequant_kernel,
                               tokens_per_tile=tokens_per_tile, n=float(n))
    out = pl.pallas_call(
        kernel,
        out_shape=jax.ShapeDtypeStruct((n_pad, D), weight.dtype),
        grid_spec=pltpu.PrefetchScalarGridSpec(
            num_scalar_prefetch=1,                    # ids -> SMEM
            grid=(n_pad // tokens_per_tile,),
            in_specs=[
                pl.BlockSpec(memory_space=pltpu.MemorySpace.SMEM),  # [scale, 1/scale]
                pl.BlockSpec(memory_space=pl.ANY),                  # weight in HBM
            ],
            out_specs=pl.BlockSpec((tokens_per_tile, D), lambda i, ids: (i, 0)),
            scratch_shapes=[
                pltpu.VMEM((2, tokens_per_tile, D), weight.dtype),  # double buffer
                pltpu.SemaphoreType.DMA((2, tokens_per_tile)),
            ],
        ),
        compiler_params=pltpu.CompilerParams(
            # "arbitrary": the double-buffer prefetch chain carries state
            # across consecutive grid steps, so the axis must stay sequential.
            dimension_semantics=("arbitrary",)),
    )(ids, scale_pair, weight)
    return out[:N]


# ----------------------------------------------------------------------------
# Glue (plain JAX): make_positions + wrapper mirroring QuantEmbedding.forward
# ----------------------------------------------------------------------------
def make_positions(x, padding_idx=0):
    mask = (x != padding_idx).astype(jnp.int32)
    return jnp.cumsum(mask, axis=1) * mask + padding_idx


def quant_embedding_forward(x, weight, weight_bit=8, is_positional=False,
                            quant_mode="symmetric", weight_scaling_factor=None):
    """Returns (emb, weight_scaling_factor) like QuantEmbedding.forward.

    Pass `weight_scaling_factor` (a scalar) to reuse a cached scale and skip
    the full-table abs-max scan when the weight has not changed.
    """
    if quant_mode == "none":
        # TODO(synk): 'none' path is a plain float gather; only the quantized
        # path is implemented as the Pallas hot path here.
        return weight[x], None

    n = 2 ** (weight_bit - 1) - 1
    if weight_scaling_factor is None:
        absmax = weight_absmax(weight)                       # Pallas reduction
        scale = jnp.maximum(absmax, 1e-8) / n
    else:
        scale = jnp.asarray(weight_scaling_factor, jnp.float32).reshape(())
    inv_scale = 1.0 / scale

    if is_positional:
        x = make_positions(x, padding_idx=0)

    B, S = x.shape
    ids = x.reshape(-1).astype(jnp.int32)
    emb = quant_embedding_lookup(ids, scale, inv_scale, weight, weight_bit)
    return emb.reshape(B, S, -1), scale.reshape(1).astype(jnp.float32)


# ----------------------------------------------------------------------------
# Pure-JAX reference for verification (mirrors linear_quantize's 1/scale mul)
# ----------------------------------------------------------------------------
def reference(x, weight, weight_bit=8, is_positional=False):
    n = 2 ** (weight_bit - 1) - 1
    scale = jnp.maximum(jnp.max(jnp.abs(weight)), 1e-8) / n
    wq = jnp.clip(jnp.round(weight * (1.0 / scale)), -n, n - 1)
    if is_positional:
        x = make_positions(x)
    return wq[x] * scale, scale.reshape(1)


if __name__ == "__main__":
    key = jax.random.PRNGKey(0)
    weight_bit = 8

    # --- case 1: aligned shapes -------------------------------------------
    V, D = 64, 128          # num_embeddings, embedding_dim
    B, S = 2, 8             # batch, seq
    wkey, xkey, key = jax.random.split(key, 3)
    weight = jax.random.normal(wkey, (V, D), dtype=jnp.float32)
    x = jax.random.randint(xkey, (B, S), 1, V, dtype=jnp.int32)

    out, scale = quant_embedding_forward(x, weight, weight_bit=weight_bit)
    out = jax.block_until_ready(out)
    ref_out, ref_scale = reference(x, weight, weight_bit=weight_bit)
    assert jnp.allclose(out, ref_out, rtol=1e-5, atol=1e-5), "embedding mismatch"
    assert jnp.allclose(scale, ref_scale, rtol=1e-6, atol=1e-8), "scale mismatch"

    # positional path (token ids replaced by positions)
    out_p, _ = quant_embedding_forward(x, weight, weight_bit=weight_bit,
                                       is_positional=True)
    out_p = jax.block_until_ready(out_p)
    ref_p, _ = reference(x, weight, weight_bit=weight_bit, is_positional=True)
    assert jnp.allclose(out_p, ref_p, rtol=1e-5, atol=1e-5), "positional mismatch"

    # cached-scale path (skips the abs-max scan)
    out_c, _ = quant_embedding_forward(x, weight, weight_bit=weight_bit,
                                       weight_scaling_factor=ref_scale[0])
    out_c = jax.block_until_ready(out_c)
    assert jnp.allclose(out_c, ref_out, rtol=1e-5, atol=1e-5), "cached-scale mismatch"

    # --- case 2: unaligned vocab / token count (remainder + padding paths) --
    V2, D2 = 70, 128
    B2, S2 = 2, 7
    wkey2, xkey2 = jax.random.split(key)
    weight2 = jax.random.normal(wkey2, (V2, D2), dtype=jnp.float32)
    x2 = jax.random.randint(xkey2, (B2, S2), 1, V2, dtype=jnp.int32)

    out2, scale2 = quant_embedding_forward(x2, weight2, weight_bit=weight_bit)
    out2 = jax.block_until_ready(out2)
    ref_out2, ref_scale2 = reference(x2, weight2, weight_bit=weight_bit)
    assert jnp.allclose(out2, ref_out2, rtol=1e-5, atol=1e-5), "unaligned embedding mismatch"
    assert jnp.allclose(scale2, ref_scale2, rtol=1e-6, atol=1e-8), "unaligned scale mismatch"

    print("KERNEL_OK")
</pallas_src>

<mosaic_0001>
module attributes {stable_mosaic.version = 11 : i64} {
  func.func @_absmax_kernel(%arg0: i32, %arg1: i32, %arg2: memref<64x128xf32, #tpu.memory_space<vmem>>, %arg3: memref<8x128xf32, #tpu.memory_space<vmem>>) attributes {dimension_semantics = [#tpu.dimension_semantics<parallel>, #tpu.dimension_semantics<arbitrary>], iteration_bounds = array<i64: 1, 1>, scalar_prefetch = 0 : i64, scratch_operands = 0 : i64, tpu.core_type = #tpu.core_type<tc>, window_params = [{transform_indices = @transform_0, window_bounds = array<i64: 64, 128>}, {transform_indices = @transform_1, window_bounds = array<i64: 8, 128>}]} {
    %c0_i32 = arith.constant 0 : i32
    %0 = arith.cmpi eq, %arg1, %c0_i32 : i32
    %1 = arith.extui %0 : i1 to i32
    %c0_i32_0 = arith.constant 0 : i32
    %2 = arith.cmpi ne, %1, %c0_i32_0 : i32
    scf.if %2 {
      %cst_6 = arith.constant 0.000000e+00 : f32
      %10 = vector.broadcast %cst_6 : f32 to vector<8x128xf32>
      %c0_7 = arith.constant 0 : index
      %c0_8 = arith.constant 0 : index
      %11 = vector.load %arg3[%c0_7, %c0_8] : memref<8x128xf32, #tpu.memory_space<vmem>>, vector<8x128xf32>
      tpu.vector_store %arg3[%c0_7, %c0_8], %10 {strides = array<i32>} : memref<8x128xf32, #tpu.memory_space<vmem>>, vector<8x128xf32>,
    } else {
    }
    %c0 = arith.constant 0 : index
    %c0_1 = arith.constant 0 : index
    %3 = vector.load %arg2[%c0, %c0_1] : memref<64x128xf32, #tpu.memory_space<vmem>>, vector<64x128xf32>
    %4 = math.absf %3 : vector<64x128xf32>
    %5 = vector.shape_cast %4 : vector<64x128xf32> to vector<8x8x128xf32>
    %c0_2 = arith.constant 0 : index
    %c0_3 = arith.constant 0 : index
    %6 = vector.load %arg3[%c0_2, %c0_3] : memref<8x128xf32, #tpu.memory_space<vmem>>, vector<8x128xf32>
    %cst = arith.constant dense<0xFF800000> : vector<8x128xf32>
    %7 = vector.multi_reduction <maximumf>, %5, %cst [0] : vector<8x8x128xf32> to vector<8x128xf32>
    %8 = arith.maximumf %6, %7 : vector<8x128xf32>
    %c0_4 = arith.constant 0 : index
    %c0_5 = arith.constant 0 : index
    %9 = vector.load %arg3[%c0_4, %c0_5] : memref<8x128xf32, #tpu.memory_space<vmem>>, vector<8x128xf32>
    tpu.vector_store %arg3[%c0_4, %c0_5], %8 {strides = array<i32>} : memref<8x128xf32, #tpu.memory_space<vmem>>, vector<8x128xf32>,
    return
  }
  func.func @transform_0(%arg0: i32, %arg1: i32) -> (i32, i32) {
    %c1_i32 = arith.constant 1 : i32
    %0 = arith.muli %arg0, %c1_i32 : i32
    %1 = arith.addi %0, %arg1 : i32
    %c0_i32 = arith.constant 0 : i32
    %c0_i32_0 = arith.constant 0 : i32
    return %1, %c0_i32 : i32, i32
  }
  func.func @transform_1(%arg0: i32, %arg1: i32) -> (i32, i32) {
    %c0_i32 = arith.constant 0 : i32
    %c0_i32_0 = arith.constant 0 : i32
    return %arg0, %c0_i32 : i32, i32
  }
}

</mosaic_0001>

<llo_original>
// kernel: tpu_custom_call.1
$region0: #{tpu_custom_call.1}
  #allocation0 [shape = 'u32[]', space=smem, size = 0x4, offset = 0x4, fixed_abs, tag = 'smem constant byte address 0x4 - core index']
  #allocation1 [shape = 'u32[144,128]{1,0:T(1,128)}', space=vmem, size = 0x12000, scoped, tag = 'internal scratch']
  %s0 = inlined_call_operand.hbm [shape: f32[64,128], index: 0, kind: input, shape index: {}]
  %s1 = inlined_call_operand.hbm [shape: f32[8,128], index: 1, kind: output, shape index: {}]
  %s2 = sld [smem:[#allocation0]]
  $region22: #{tpu_custom_call.1} parent=0
    _
  %s4 = ssub.s32 1, %s2
  %s5 = scalar_select 0, %s4, %s2
  $region1: #{tpu_custom_call.1} parent=0
    #allocation2 [shape = 'u8[32768]{0}', space=vmem, size = 0x8000, scoped, tag = 'input window, operand 0, single buffered']
    #allocation3 [shape = 's32[1]{0}', space=sflag, size = 0x4, scoped, tag = 'scoped memory for tpu_custom_call.1']
    #allocation4 [shape = 's32[1]{0}', space=sflag, size = 0x4, scoped, tag = 'scoped memory for tpu_custom_call.1']
    #allocation5 [shape = 'u8[4096]{0}', space=vmem, size = 0x1000, scoped, tag = 'output window, operand 0, single buffered']
    %6 = vsyncpa [#allocation3], 0
    %7 = vsyncpa [#allocation4], 0
    // Predicated region
    $region2: #{tpu_custom_call.1} parent=1 // pred_check
      _
    $region3: #{tpu_custom_call.1} parent=1 // pred_check_branch
      %9 = sbr.rel (0) target = $region5
    $region4: #{tpu_custom_call.1} parent=1 // pred_region
      %s10 = sadd.s32 0, 0
      %s11 = smul.u32 8, %s10
      %s13 = ssub.s32 1024, 1024
      %14 = vsyncadd [#allocation3], %s13
      %s15 = smul.addr %s11, 128
      %s16 = scalar_lea.hbm %s0, %s15
      %s17 = sshll.u32 [#allocation2], 4
      %s18 = int_to_ptr.vmem [resolvable:$true] %s17
      %23 = dma.hbm_to_vmem [thread:$0]  %s16, 1024, %s18, [#allocation3], 128, 128, 8
    $region5: #{tpu_custom_call.1} parent=1 // pred_fallthru
      _
    // Predicated region
    $region6: #{tpu_custom_call.1} parent=1 // pred_check
      _
    $region7: #{tpu_custom_call.1} parent=1 // pred_check_branch
      %25 = sbr.rel (0) target = $region9
    $region8: #{tpu_custom_call.1} parent=1 // pred_region
      %26 = dma.done [#allocation3], 1024
    $region9: #{tpu_custom_call.1} parent=1 // pred_fallthru
      _
    %s27 = sadd.s32 0, 0
    %s28 = smul.u32 8, %s27
    %p29 = scmp.eq.s32.totalorder 0, 0
    // Predicated region
    $region10: #{tpu_custom_call.1} parent=1 // pred_check
      %p30 = pneg %p29
    $region11: #{tpu_custom_call.1} parent=1 // pred_check_branch
      %32 = sbr.rel (%p30) target = $region13
    $region12: #{tpu_custom_call.1} parent=1 // pred_region
      %33 = vst [vmem:[#allocation5] sm:$0xff] 0.0
    $region13: #{tpu_custom_call.1} parent=1 // pred_fallthru
      _
    %v34 = vld [vmem:[#allocation2] sm:$0xff]
    %v35 = vld [vmem:[#allocation2 + $0x8] sm:$0xff]
    %v36 = vld [vmem:[#allocation2 + $0x10] sm:$0xff]
    %v37 = vld [vmem:[#allocation2 + $0x18] sm:$0xff]
    %v38 = vld [vmem:[#allocation2 + $0x20] sm:$0xff]
    %v39 = vld [vmem:[#allocation2 + $0x28] sm:$0xff]
    %v40 = vld [vmem:[#allocation2 + $0x30] sm:$0xff]
    %v41 = vld [vmem:[#allocation2 + $0x38] sm:$0xff]
    %v42 = vand.u32 2147483647, %v34
    %v43 = vand.u32 2147483647, %v35
    %v44 = vand.u32 2147483647, %v36
    %v45 = vand.u32 2147483647, %v37
    %v46 = vand.u32 2147483647, %v38
    %v47 = vand.u32 2147483647, %v39
    %v48 = vand.u32 2147483647, %v40
    %v49 = vand.u32 2147483647, %v41
    %v50 = vld [vmem:[#allocation5] sm:$0xff]
    %v51 = vmax.f32 %v42, %v46
    %v52 = vmax.f32 %v43, %v47
    %v53 = vmax.f32 %v44, %v48
    %v54 = vmax.f32 %v45, %v49
    %v55 = vmax.f32 %v51, %v52
    %v56 = vmax.f32 %v53, %v54
    %v57 = vmax.f32 %v55, %v56
    %v58 = vmax.f32 %v50, %v57
    %59 = vst [vmem:[#allocation5] sm:$0xff] %v58
    // Predicated region
    $region14: #{tpu_custom_call.1} parent=1 // pred_check
      _
    $region15: #{tpu_custom_call.1} parent=1 // pred_check_branch
      %61 = sbr.rel (0) target = $region17
    $region16: #{tpu_custom_call.1} parent=1 // pred_region
      %s63 = ssub.s32 128, 128
      %64 = vsyncadd [#allocation4], %s63
      %s66 = sshll.u32 [#allocation5], 4
      %s67 = int_to_ptr.vmem [resolvable:$true] %s66
      %69 = dma.vmem_to_hbm [thread:$0]  %s67, 128, %s1, [#allocation4]
    $region17: #{tpu_custom_call.1} parent=1 // pred_fallthru
      _
    // Predicated region
    $region18: #{tpu_custom_call.1} parent=1 // pred_check
      _
    $region19: #{tpu_custom_call.1} parent=1 // pred_check_branch
      %71 = sbr.rel (0) target = $region21
    $region20: #{tpu_custom_call.1} parent=1 // pred_region
      %72 = dma.done [#allocation4], 128
    $region21: #{tpu_custom_call.1} parent=1 // pred_fallthru
      _
    %73 = vsyncpa [#allocation3], 1
    %74 = vsyncpa [#allocation4], 1

</llo_original>
